<compile_context>
chip_gen: v5e
topology: v5e:2x2
jax: 0.10.0
libtpu: 0.0.40
codegen_flags: <defaults>
</compile_context>

<pallas_src>
import functools
import math

import jax
import jax.numpy as jnp
from jax.experimental import pallas as pl
from jax.experimental.pallas import tpu as pltpu

_INV_SQRT2 = 1.0 / math.sqrt(2.0)


def _round_up(x, m):
    return ((x + m - 1) // m) * m


def _adapter_kernel(x_ref, w1_ref, b1_ref, w2_ref, b2_ref, o_ref, *, skip_connect):
    # x_ref : (tm, D)  tile of tokens (native dtype)
    # w1_ref: (D, Hp)  fc1 weight (in, out), hidden padded to a 128 multiple
    # b1_ref: (1, Hp)  fc1 bias (zero-padded)
    # w2_ref: (Hp, D)  fc2 weight (in, out), zero-padded rows
    # b2_ref: (1, D)   fc2 bias
    x = x_ref[...]

    # fc1: native-dtype operands on the MXU, f32 accumulator; bias folded in f32.
    h = jnp.dot(x, w1_ref[...], preferred_element_type=jnp.float32)
    h = h + b1_ref[...].astype(jnp.float32)

    # Exact GELU (erf formulation == nn.GELU default), f32, EUP-bound.
    h = 0.5 * h * (1.0 + jax.lax.erf(h * _INV_SQRT2))

    # fc2: cast activation back to the weight dtype (no-op for f32 weights).
    y = jnp.dot(h.astype(w2_ref.dtype), w2_ref[...],
                preferred_element_type=jnp.float32)
    y = y + b2_ref[...].astype(jnp.float32)

    if skip_connect:
        y = x.astype(jnp.float32) + y
    o_ref[...] = y.astype(o_ref.dtype)


def adapter_forward(x, w1, b1, w2, b2, *, tm=512, skip_connect=True):
    """x: [..., D]; w1: (D, H); b1: (H,); w2: (H, D); b2: (D,)."""
    orig_shape = x.shape
    D = orig_shape[-1]
    H = w1.shape[1]
    assert w1.shape == (D, H) and b1.shape == (H,)
    assert w2.shape == (H, D) and b2.shape == (D,)

    x2 = x.reshape(-1, D)
    M = x2.shape[0]
    itemsize = jnp.dtype(x.dtype).itemsize

    # Pad the hidden dim to a lane-dense multiple of 128 (numerically exact).
    Hp = _round_up(H, 128)
    if Hp != H:
        w1 = jnp.pad(w1, ((0, 0), (0, Hp - H)))
        b1 = jnp.pad(b1, (0, Hp - H))
        w2 = jnp.pad(w2, ((0, Hp - H), (0, 0)))

    # Balanced row tiling: tm <= requested max, rounded to the sublane pack
    # (16 for bf16, 8 otherwise); rows padded to n_tiles * tm with minimal
    # waste (< one sublane group per tile).
    sub = 16 if x.dtype == jnp.bfloat16 else 8
    tm_max = _round_up(min(tm, _round_up(M, sub)), sub)
    n_tiles = -(-M // tm_max)
    tm = _round_up(-(-M // n_tiles), sub)
    Mp = n_tiles * tm
    if Mp != M:
        x2 = jnp.pad(x2, ((0, Mp - M), (0, 0)))

    b1_2d = b1.reshape(1, Hp)
    b2_2d = b2.reshape(1, D)

    w_itemsize = jnp.dtype(w1.dtype).itemsize
    b_itemsize = jnp.dtype(b1.dtype).itemsize
    w_bytes = 2 * D * Hp * w_itemsize + (Hp + D) * b_itemsize
    cost = pl.CostEstimate(
        flops=4 * Mp * D * Hp + 2 * Mp * (Hp + D),
        transcendentals=Mp * Hp,
        bytes_accessed=2 * Mp * D * itemsize + w_bytes,
    )

    # VMEM budget: double-buffered x/out tiles + weights (worst case double-
    # buffered) + f32 intermediates; 2x margin, clamped to [32 MiB, 64 MiB]
    # (safe on v5e/v6e's 128 MiB and v7x's 64 MiB physical VMEM).
    est = 4 * tm * D * itemsize + 2 * w_bytes + tm * Hp * 4 + tm * D * 4
    vmem_limit = int(min(max(2 * est, 32 * 1024 * 1024), 64 * 1024 * 1024))

    kernel = functools.partial(_adapter_kernel, skip_connect=skip_connect)
    grid = (Mp // tm,)
    x_spec = pl.BlockSpec((tm, D), lambda i: (i, 0))
    out_spec = pl.BlockSpec((tm, D), lambda i: (i, 0))

    def build(weight_mode):
        def wspec(shape):
            if weight_mode is None:
                return pl.BlockSpec(shape, lambda i: (0, 0))
            return pl.BlockSpec(shape, lambda i: (0, 0), pipeline_mode=weight_mode)

        return pl.pallas_call(
            kernel,
            out_shape=jax.ShapeDtypeStruct((Mp, D), x.dtype),
            grid_spec=pltpu.PrefetchScalarGridSpec(
                num_scalar_prefetch=0,
                grid=grid,
                in_specs=[
                    x_spec,          # x tile (streamed, double-buffered)
                    wspec((D, Hp)),  # W1 (grid-invariant)
                    wspec((1, Hp)),  # b1
                    wspec((Hp, D)),  # W2
                    wspec((1, D)),   # b2
                ],
                out_specs=out_spec,
            ),
            compiler_params=pltpu.CompilerParams(
                dimension_semantics=("parallel",),
                vmem_limit_bytes=vmem_limit,
            ),
            cost_estimate=cost,
        )

    args = (x2, w1, b1_2d, w2, b2_2d)
    try:
        # Grid-invariant weights/biases: single-buffer to halve their VMEM use.
        out = jax.block_until_ready(build(pl.Buffered(buffer_count=1))(*args))
    except Exception:
        # Fallback for JAX versions without pipeline_mode support.
        out = jax.block_until_ready(build(None)(*args))

    return out[:M].reshape(orig_shape)


def init_adapter_params(key, d_features, mlp_ratio=0.25, dtype=jnp.float32):
    """Deterministic synthetic init mimicking nn.Linear default (+-1/sqrt(fan_in))."""
    d_hidden = int(d_features * mlp_ratio)
    k1, k2, k3, k4 = jax.random.split(key, 4)
    bound1 = 1.0 / math.sqrt(d_features)
    bound2 = 1.0 / math.sqrt(d_hidden)
    # stored as (in, out) == transpose of torch's (out, in)
    w1 = jax.random.uniform(k1, (d_features, d_hidden), dtype, -bound1, bound1)
    b1 = jax.random.uniform(k2, (d_hidden,), dtype, -bound1, bound1)
    w2 = jax.random.uniform(k3, (d_hidden, d_features), dtype, -bound2, bound2)
    b2 = jax.random.uniform(k4, (d_features,), dtype, -bound2, bound2)
    return w1, b1, w2, b2


def adapter_reference(x, w1, b1, w2, b2, skip_connect=True):
    h = x @ w1 + b1
    h = 0.5 * h * (1.0 + jax.lax.erf(h * _INV_SQRT2))
    y = h @ w2 + b2
    return x + y if skip_connect else y


if __name__ == "__main__":
    key = jax.random.PRNGKey(0)
    kx, kp, kx2, kx3 = jax.random.split(key, 4)

    # Small shapes consistent with the module: tokens x features,
    # D_features=32, mlp_ratio=0.25 -> hidden=8 (padded to 128 inside).
    B, N, D = 2, 8, 32
    x = jax.random.normal(kx, (B, N, D), dtype=jnp.float32)
    w1, b1, w2, b2 = init_adapter_params(kp, D, mlp_ratio=0.25)

    out = adapter_forward(x, w1, b1, w2, b2)
    out = jax.block_until_ready(out)
    ref = adapter_reference(x.reshape(-1, D), w1, b1, w2, b2).reshape(B, N, D)
    assert out.shape == x.shape and out.dtype == x.dtype
    assert jnp.allclose(out, ref, atol=1e-5, rtol=1e-5)

    # Row count not divisible by the sublane pack -> exercises row padding.
    B2, N2 = 3, 7
    x2 = jax.random.normal(kx2, (B2, N2, D), dtype=jnp.float32)
    out2 = jax.block_until_ready(adapter_forward(x2, w1, b1, w2, b2))
    ref2 = adapter_reference(x2.reshape(-1, D), w1, b1, w2, b2).reshape(B2, N2, D)
    assert jnp.allclose(out2, ref2, atol=1e-5, rtol=1e-5)

    # Multi-tile grid (M > 512) + skip_connect=False path.
    B3, N3 = 5, 130
    x3 = jax.random.normal(kx3, (B3, N3, D), dtype=jnp.float32)
    out3 = jax.block_until_ready(
        adapter_forward(x3, w1, b1, w2, b2, skip_connect=False))
    ref3 = adapter_reference(x3.reshape(-1, D), w1, b1, w2, b2,
                             skip_connect=False).reshape(B3, N3, D)
    assert jnp.allclose(out3, ref3, atol=1e-5, rtol=1e-5)

    print("KERNEL_OK")
</pallas_src>

<mosaic_0001>
module attributes {stable_mosaic.version = 11 : i64} {
  func.func @_adapter_kernel(%arg0: i32, %arg1: memref<16x32xf32, #tpu.memory_space<vmem>>, %arg2: memref<32x128xf32, #tpu.memory_space<vmem>>, %arg3: memref<1x128xf32, #tpu.memory_space<vmem>>, %arg4: memref<128x32xf32, #tpu.memory_space<vmem>>, %arg5: memref<1x32xf32, #tpu.memory_space<vmem>>, %arg6: memref<16x32xf32, #tpu.memory_space<vmem>>) attributes {dimension_semantics = [#tpu.dimension_semantics<parallel>], iteration_bounds = array<i64: 1>, scalar_prefetch = 0 : i64, scratch_operands = 0 : i64, tpu.core_type = #tpu.core_type<tc>, window_params = [{transform_indices = @transform_0, window_bounds = array<i64: 16, 32>}, {pipeline_mode = #tpu.pipeline_mode<synchronous>, transform_indices = @transform_1, window_bounds = array<i64: 32, 128>}, {pipeline_mode = #tpu.pipeline_mode<synchronous>, transform_indices = @transform_2, window_bounds = array<i64: 1, 128>}, {pipeline_mode = #tpu.pipeline_mode<synchronous>, transform_indices = @transform_3, window_bounds = array<i64: 128, 32>}, {pipeline_mode = #tpu.pipeline_mode<synchronous>, transform_indices = @transform_4, window_bounds = array<i64: 1, 32>}, {transform_indices = @transform_5, window_bounds = array<i64: 16, 32>}]} {
    %c0 = arith.constant 0 : index
    %c0_0 = arith.constant 0 : index
    %0 = vector.load %arg1[%c0, %c0_0] : memref<16x32xf32, #tpu.memory_space<vmem>>, vector<16x32xf32>
    %c0_1 = arith.constant 0 : index
    %c0_2 = arith.constant 0 : index
    %1 = vector.load %arg2[%c0_1, %c0_2] : memref<32x128xf32, #tpu.memory_space<vmem>>, vector<32x128xf32>
    %cst = arith.constant dense<0.000000e+00> : vector<16x128xf32>
    %2 = tpu.matmul %0, %1, %cst {dimension_numbers = #tpu.dot_dimension_numbers<[1], [0], [0], [1], [0, 0, 1, 1], [], []>} : vector<16x32xf32>, vector<32x128xf32>, vector<16x128xf32> -> vector<16x128xf32>
    %c0_3 = arith.constant 0 : index
    %c0_4 = arith.constant 0 : index
    %3 = vector.load %arg3[%c0_3, %c0_4] : memref<1x128xf32, #tpu.memory_space<vmem>>, vector<1x128xf32>
    %4 = vector.broadcast %3 : vector<1x128xf32> to vector<16x128xf32>
    %5 = arith.addf %2, %4 : vector<16x128xf32>
    %cst_5 = arith.constant 5.000000e-01 : f32
    %6 = vector.broadcast %cst_5 : f32 to vector<16x128xf32>
    %7 = arith.mulf %6, %5 : vector<16x128xf32>
    %cst_6 = arith.constant 0.707106769 : f32
    %8 = vector.broadcast %cst_6 : f32 to vector<16x128xf32>
    %9 = arith.mulf %5, %8 : vector<16x128xf32>
    %10 = math.erf %9 : vector<16x128xf32>
    %cst_7 = arith.constant 1.000000e+00 : f32
    %11 = vector.broadcast %cst_7 : f32 to vector<16x128xf32>
    %12 = arith.addf %11, %10 : vector<16x128xf32>
    %13 = arith.mulf %7, %12 : vector<16x128xf32>
    %c0_8 = arith.constant 0 : index
    %c0_9 = arith.constant 0 : index
    %14 = vector.load %arg4[%c0_8, %c0_9] : memref<128x32xf32, #tpu.memory_space<vmem>>, vector<128x32xf32>
    %cst_10 = arith.constant dense<0.000000e+00> : vector<16x32xf32>
    %15 = tpu.matmul %13, %14, %cst_10 {dimension_numbers = #tpu.dot_dimension_numbers<[1], [0], [0], [1], [0, 0, 1, 1], [], []>} : vector<16x128xf32>, vector<128x32xf32>, vector<16x32xf32> -> vector<16x32xf32>
    %c0_11 = arith.constant 0 : index
    %c0_12 = arith.constant 0 : index
    %16 = vector.load %arg5[%c0_11, %c0_12] : memref<1x32xf32, #tpu.memory_space<vmem>>, vector<1x32xf32>
    %17 = vector.broadcast %16 : vector<1x32xf32> to vector<16x32xf32>
    %18 = arith.addf %15, %17 : vector<16x32xf32>
    %19 = arith.addf %0, %18 : vector<16x32xf32>
    %c0_13 = arith.constant 0 : index
    %c0_14 = arith.constant 0 : index
    %20 = vector.load %arg6[%c0_13, %c0_14] : memref<16x32xf32, #tpu.memory_space<vmem>>, vector<16x32xf32>
    tpu.vector_store %arg6[%c0_13, %c0_14], %19 {strides = array<i32>} : memref<16x32xf32, #tpu.memory_space<vmem>>, vector<16x32xf32>,
    return
  }
  func.func @transform_0(%arg0: i32) -> (i32, i32) {
    %c0_i32 = arith.constant 0 : i32
    %c0_i32_0 = arith.constant 0 : i32
    return %arg0, %c0_i32 : i32, i32
  }
  func.func @transform_1(%arg0: i32) -> (i32, i32) {
    %c0_i32 = arith.constant 0 : i32
    %c0_i32_0 = arith.constant 0 : i32
    %c0_i32_1 = arith.constant 0 : i32
    return %c0_i32, %c0_i32_0 : i32, i32
  }
  func.func @transform_2(%arg0: i32) -> (i32, i32) {
    %c0_i32 = arith.constant 0 : i32
    %c0_i32_0 = arith.constant 0 : i32
    %c0_i32_1 = arith.constant 0 : i32
    return %c0_i32, %c0_i32_0 : i32, i32
  }
  func.func @transform_3(%arg0: i32) -> (i32, i32) {
    %c0_i32 = arith.constant 0 : i32
    %c0_i32_0 = arith.constant 0 : i32
    %c0_i32_1 = arith.constant 0 : i32
    return %c0_i32, %c0_i32_0 : i32, i32
  }
  func.func @transform_4(%arg0: i32) -> (i32, i32) {
    %c0_i32 = arith.constant 0 : i32
    %c0_i32_0 = arith.constant 0 : i32
    %c0_i32_1 = arith.constant 0 : i32
    return %c0_i32, %c0_i32_0 : i32, i32
  }
  func.func @transform_5(%arg0: i32) -> (i32, i32) {
    %c0_i32 = arith.constant 0 : i32
    %c0_i32_0 = arith.constant 0 : i32
    return %arg0, %c0_i32 : i32, i32
  }
}

module attributes {stable_mosaic.version = 11 : i64} {
  func.func @_adapter_kernel(%arg0: i32, %arg1: memref<16x32xf32, #tpu.memory_space<vmem>>, %arg2: memref<32x128xf32, #tpu.memory_space<vmem>>, %arg3: memref<1x128xf32, #tpu.memory_space<vmem>>, %arg4: memref<128x32xf32, #tpu.memory_space<vmem>>, %arg5: memref<1x32xf32, #tpu.memory_space<vmem>>, %arg6: memref<16x32xf32, #tpu.memory_space<vmem>>) attributes {dimension_semantics = [#tpu.dimension_semantics<parallel>], iteration_bounds = array<i64: 1>, scalar_prefetch = 0 : i64, scratch_operands = 0 : i64, tpu.core_type = #tpu.core_type<tc>, window_params = [{transform_indices = @transform_0, window_bounds = array<i64: 16, 32>}, {pipeline_mode = #tpu.pipeline_mode<synchronous>, transform_indices = @transform_1, window_bounds = array<i64: 32, 128>}, {pipeline_mode = #tpu.pipeline_mode<synchronous>, transform_indices = @transform_2, window_bounds = array<i64: 1, 128>}, {pipeline_mode = #tpu.pipeline_mode<synchronous>, transform_indices = @transform_3, window_bounds = array<i64: 128, 32>}, {pipeline_mode = #tpu.pipeline_mode<synchronous>, transform_indices = @transform_4, window_bounds = array<i64: 1, 32>}, {transform_indices = @transform_5, window_bounds = array<i64: 16, 32>}]} {
    %c0 = arith.constant 0 : index
    %c0_0 = arith.constant 0 : index
    %0 = vector.load %arg1[%c0, %c0_0] : memref<16x32xf32, #tpu.memory_space<vmem>>, vector<16x32xf32>
    %c0_1 = arith.constant 0 : index
    %c0_2 = arith.constant 0 : index
    %1 = vector.load %arg2[%c0_1, %c0_2] : memref<32x128xf32, #tpu.memory_space<vmem>>, vector<32x128xf32>
    %cst = arith.constant dense<0.000000e+00> : vector<16x128xf32>
    %2 = tpu.matmul %0, %1, %cst {dimension_numbers = #tpu.dot_dimension_numbers<[1], [0], [0], [1], [0, 0, 1, 1], [], []>} : vector<16x32xf32>, vector<32x128xf32>, vector<16x128xf32> -> vector<16x128xf32>
    %c0_3 = arith.constant 0 : index
    %c0_4 = arith.constant 0 : index
    %3 = vector.load %arg3[%c0_3, %c0_4] : memref<1x128xf32, #tpu.memory_space<vmem>>, vector<1x128xf32>
    %4 = vector.broadcast %3 : vector<1x128xf32> to vector<16x128xf32>
    %5 = arith.addf %2, %4 : vector<16x128xf32>
    %cst_5 = arith.constant 5.000000e-01 : f32
    %6 = vector.broadcast %cst_5 : f32 to vector<16x128xf32>
    %7 = arith.mulf %6, %5 : vector<16x128xf32>
    %cst_6 = arith.constant 0.707106769 : f32
    %8 = vector.broadcast %cst_6 : f32 to vector<16x128xf32>
    %9 = arith.mulf %5, %8 : vector<16x128xf32>
    %10 = math.erf %9 : vector<16x128xf32>
    %cst_7 = arith.constant 1.000000e+00 : f32
    %11 = vector.broadcast %cst_7 : f32 to vector<16x128xf32>
    %12 = arith.addf %11, %10 : vector<16x128xf32>
    %13 = arith.mulf %7, %12 : vector<16x128xf32>
    %c0_8 = arith.constant 0 : index
    %c0_9 = arith.constant 0 : index
    %14 = vector.load %arg4[%c0_8, %c0_9] : memref<128x32xf32, #tpu.memory_space<vmem>>, vector<128x32xf32>
    %cst_10 = arith.constant dense<0.000000e+00> : vector<16x32xf32>
    %15 = tpu.matmul %13, %14, %cst_10 {dimension_numbers = #tpu.dot_dimension_numbers<[1], [0], [0], [1], [0, 0, 1, 1], [], []>} : vector<16x128xf32>, vector<128x32xf32>, vector<16x32xf32> -> vector<16x32xf32>
    %c0_11 = arith.constant 0 : index
    %c0_12 = arith.constant 0 : index
    %16 = vector.load %arg5[%c0_11, %c0_12] : memref<1x32xf32, #tpu.memory_space<vmem>>, vector<1x32xf32>
    %17 = vector.broadcast %16 : vector<1x32xf32> to vector<16x32xf32>
    %18 = arith.addf %15, %17 : vector<16x32xf32>
    %19 = arith.addf %0, %18 : vector<16x32xf32>
    %c0_13 = arith.constant 0 : index
    %c0_14 = arith.constant 0 : index
    %20 = vector.load %arg6[%c0_13, %c0_14] : memref<16x32xf32, #tpu.memory_space<vmem>>, vector<16x32xf32>
    tpu.vector_store %arg6[%c0_13, %c0_14], %19 {strides = array<i32>} : memref<16x32xf32, #tpu.memory_space<vmem>>, vector<16x32xf32>,
    return
  }
  func.func @transform_0(%arg0: i32) -> (i32, i32) {
    %c0_i32 = arith.constant 0 : i32
    %c0_i32_0 = arith.constant 0 : i32
    return %arg0, %c0_i32 : i32, i32
  }
  func.func @transform_1(%arg0: i32) -> (i32, i32) {
    %c0_i32 = arith.constant 0 : i32
    %c0_i32_0 = arith.constant 0 : i32
    %c0_i32_1 = arith.constant 0 : i32
    return %c0_i32, %c0_i32_0 : i32, i32
  }
  func.func @transform_2(%arg0: i32) -> (i32, i32) {
    %c0_i32 = arith.constant 0 : i32
    %c0_i32_0 = arith.constant 0 : i32
    %c0_i32_1 = arith.constant 0 : i32
    return %c0_i32, %c0_i32_0 : i32, i32
  }
  func.func @transform_3(%arg0: i32) -> (i32, i32) {
    %c0_i32 = arith.constant 0 : i32
    %c0_i32_0 = arith.constant 0 : i32
    %c0_i32_1 = arith.constant 0 : i32
    return %c0_i32, %c0_i32_0 : i32, i32
  }
  func.func @transform_4(%arg0: i32) -> (i32, i32) {
    %c0_i32 = arith.constant 0 : i32
    %c0_i32_0 = arith.constant 0 : i32
    %c0_i32_1 = arith.constant 0 : i32
    return %c0_i32, %c0_i32_0 : i32, i32
  }
  func.func @transform_5(%arg0: i32) -> (i32, i32) {
    %c0_i32 = arith.constant 0 : i32
    %c0_i32_0 = arith.constant 0 : i32
    return %arg0, %c0_i32 : i32, i32
  }
}

</mosaic_0001>

<llo_original>
// kernel: tpu_custom_call.1
$region0: #{tpu_custom_call.1}
  #allocation0 [shape = 'u32[]', space=smem, size = 0x4, offset = 0x4, fixed_abs, tag = 'smem constant byte address 0x4 - core index']
  #allocation1 [shape = 'u32[72,128]{1,0:T(1,128)}', space=vmem, size = 0x9000, scoped, tag = 'internal scratch']
  %s0 = inlined_call_operand.vmem [shape: f32[16,32], index: 0, kind: input, shape index: {}]
  %s1 = inlined_call_operand.vmem [shape: f32[32,128], index: 1, kind: input, shape index: {}]
  %s2 = inlined_call_operand.vmem [shape: f32[1,128], index: 2, kind: input, shape index: {}]
  %s3 = inlined_call_operand.vmem [shape: f32[128,32], index: 3, kind: input, shape index: {}]
  %s4 = inlined_call_operand.vmem [shape: f32[1,32], index: 4, kind: input, shape index: {}]
  %s5 = inlined_call_operand.hbm [shape: f32[16,32], index: 5, kind: output, shape index: {}]
  %s6 = sld [smem:[#allocation0]]
  $region30: #{tpu_custom_call.1} parent=0
    _
  %s8 = ssub.s32 1, %s6
  %s9 = scalar_select 0, %s8, %s6
  $region1: #{tpu_custom_call.1} parent=0
    #allocation2 [shape = 'u8[8192]{0}', space=vmem, size = 0x2000, scoped, tag = 'output window, operand 0, single buffered']
    #allocation3 [shape = 's32[1]{0}', space=sflag, size = 0x4, scoped, tag = 'scoped memory for tpu_custom_call.1']
    %10 = vsyncpa [#allocation3], 0
    // Predicated region
    $region2: #{tpu_custom_call.1} parent=1 // pred_check
      _
    $region3: #{tpu_custom_call.1} parent=1 // pred_check_branch
      %12 = sbr.rel (0) target = $region5
    $region4: #{tpu_custom_call.1} parent=1 // pred_region
      _
    $region5: #{tpu_custom_call.1} parent=1 // pred_fallthru
      _
    // Predicated region
    $region6: #{tpu_custom_call.1} parent=1 // pred_check
      _
    $region7: #{tpu_custom_call.1} parent=1 // pred_check_branch
      %14 = sbr.rel (0) target = $region9
    $region8: #{tpu_custom_call.1} parent=1 // pred_region
      _
    $region9: #{tpu_custom_call.1} parent=1 // pred_fallthru
      _
    // Predicated region
    $region10: #{tpu_custom_call.1} parent=1 // pred_check
      _
    $region11: #{tpu_custom_call.1} parent=1 // pred_check_branch
      %16 = sbr.rel (0) target = $region13
    $region12: #{tpu_custom_call.1} parent=1 // pred_region
      _
    $region13: #{tpu_custom_call.1} parent=1 // pred_fallthru
      _
    // Predicated region
    $region14: #{tpu_custom_call.1} parent=1 // pred_check
      _
    $region15: #{tpu_custom_call.1} parent=1 // pred_check_branch
      %18 = sbr.rel (0) target = $region17
    $region16: #{tpu_custom_call.1} parent=1 // pred_region
      _
    $region17: #{tpu_custom_call.1} parent=1 // pred_fallthru
      _
    // Predicated region
    $region18: #{tpu_custom_call.1} parent=1 // pred_check
      _
    $region19: #{tpu_custom_call.1} parent=1 // pred_check_branch
      %20 = sbr.rel (0) target = $region21
    $region20: #{tpu_custom_call.1} parent=1 // pred_region
      _
    $region21: #{tpu_custom_call.1} parent=1 // pred_fallthru
      _
    %v21 = vld [vmem:[%s0] sm:$0xff]
    %v22 = vld [vmem:[%s0 + $0x8] sm:$0xff]
    %v23 = vld [vmem:[%s1] sm:$0xff]
    %v24 = vld [vmem:[%s1 + $0x8] sm:$0xff]
    %v25 = vld [vmem:[%s1 + $0x10] sm:$0xff]
    %v26 = vld [vmem:[%s1 + $0x18] sm:$0xff]
    %v27 = vld [vmem:[%s2] sm:$0x1]
    %v29 = vperm.slane %v27, 0
    %vm31 = vcmask 261120
    %v33 = vsel %vm31, %v21, 0
    %v36 = vsel %vm31, %v22, 0
    %38 = vmatpush.msra.mxu0 0.0
    %39 = vmatpush.msra.mxu0 0.0
    %40 = vmatpush.msra.mxu0 0.0
    %41 = vmatpush.msra.mxu0 0.0
    %42 = vmatpush.msra.mxu0 0.0
    %43 = vmatpush.msra.mxu0 0.0
    %44 = vmatpush.msra.mxu0 0.0
    %45 = vmatpush.msra.mxu0 0.0
    %46 = vmatpush.msra.mxu0 0.0
    %47 = vmatpush.msra.mxu0 0.0
    %48 = vmatpush.msra.mxu0 0.0
    %49 = vmatpush.msra.mxu0 0.0
    %50 = vmatpush.msra.mxu0 %v26
    %51 = vmatpush.msra.mxu0 %v25
    %52 = vmatpush.msra.mxu0 %v24
    %53 = vmatpush.msra.mxu0 %v23
    %54 = vmatmul.f32.gmra.mxu0 %v33
    %v55 = vpop.f32.mrf.mxu0
    %v56 = vadd.f32 %v29, %v55
    %57 = vmatmul.f32.gmra.mxu0 %v36
    %v58 = vpop.f32.mrf.mxu0
    %v59 = vadd.f32 %v29, %v58
    %60 = vdwg.mxu0
    %v61 = vmul.f32 %v56, 0.5
    %v62 = vmul.f32 %v59, 0.5
    %v63 = vmul.f32 %v56, 0.70710677
    %v64 = vmul.f32 %v59, 0.70710677
    %v65 = vmul.f32 %v63, %v63
    %v66 = vmin.f32 16.0, %v65
    %v67 = vmul.f32 %v66, 2.1237322e-06
    %v68 = vadd.f32 %v67, 0.00028619796
    %v69 = vmul.f32 %v66, %v68
    %v70 = vadd.f32 %v69, 0.0036580483
    %v71 = vmul.f32 %v66, %v70
    %v72 = vadd.f32 %v71, 0.05243302
    %v73 = vmul.f32 %v66, %v72
    %v74 = vadd.f32 %v73, 0.18741608
    %v75 = vmul.f32 %v66, %v74
    %v76 = vadd.f32 %v75, 1.1283791
    %v77 = vmul.f32 %v63, %v76
    %v78 = vmul.f32 %v66, 3.8918573e-05
    %v79 = vadd.f32 %v78, 0.001143296
    %v80 = vmul.f32 %v66, %v79
    %v81 = vadd.f32 %v80, 0.014752088
    %v82 = vmul.f32 %v66, %v81
    %v83 = vadd.f32 %v82, 0.112945676
    %v84 = vmul.f32 %v66, %v83
    %v85 = vadd.f32 %v84, 0.4994258
    %v86 = vmul.f32 %v66, %v85
    %v87 = vadd.f32 %v86, 1.0
    %v88 = vrcp.pop %v87
    %v89 = vmul.f32 %v87, %v88
    %v90 = vsub.f32 1.0, %v89
    %v91 = vmul.f32 %v88, %v90
    %v92 = vadd.f32 %v88, %v91
    %vm93 = vweird.f32 %v87
    %vm94 = vweird.f32 %v88
    %vm95 = vmor %vm93, %vm94
    %v96 = vsel %vm95, %v88, %v92
    %v97 = vand.u32 2147483647, %v87
    %vm98 = vcmp.eq.f32.partialorder %v97, 8.507059e+37
    %v99 = vand.u32 %v87, 2147483648
    %v100 = vor.u32 1.1754944e-38, %v99
    %v101 = vsel %vm98, %v100, %v96
    %v102 = vmul.f32 %v77, %v101
    %v103 = vmin.f32 %v102, 1.0
    %v104 = vmax.f32 %v103, -1.0
    %v105 = vmul.f32 %v64, %v64
    %v106 = vmin.f32 16.0, %v105
    %v107 = vmul.f32 %v106, 2.1237322e-06
    %v108 = vadd.f32 %v107, 0.00028619796
    %v109 = vmul.f32 %v106, %v108
    %v110 = vadd.f32 %v109, 0.0036580483
    %v111 = vmul.f32 %v106, %v110
    %v112 = vadd.f32 %v111, 0.05243302
    %v113 = vmul.f32 %v106, %v112
    %v114 = vadd.f32 %v113, 0.18741608
    %v115 = vmul.f32 %v106, %v114
    %v116 = vadd.f32 %v115, 1.1283791
    %v117 = vmul.f32 %v64, %v116
    %v118 = vmul.f32 %v106, 3.8918573e-05
    %v119 = vadd.f32 %v118, 0.001143296
    %v120 = vmul.f32 %v106, %v119
    %v121 = vadd.f32 %v120, 0.014752088
    %v122 = vmul.f32 %v106, %v121
    %v123 = vadd.f32 %v122, 0.112945676
    %v124 = vmul.f32 %v106, %v123
    %v125 = vadd.f32 %v124, 0.4994258
    %v126 = vmul.f32 %v106, %v125
    %v127 = vadd.f32 %v126, 1.0
    %v128 = vrcp.pop %v127
    %v129 = vmul.f32 %v127, %v128
    %v130 = vsub.f32 1.0, %v129
    %v131 = vmul.f32 %v128, %v130
    %v132 = vadd.f32 %v128, %v131
    %vm133 = vweird.f32 %v127
    %vm134 = vweird.f32 %v128
    %vm135 = vmor %vm133, %vm134
    %v136 = vsel %vm135, %v128, %v132
    %v137 = vand.u32 2147483647, %v127
    %vm138 = vcmp.eq.f32.partialorder %v137, 8.507059e+37
    %v139 = vand.u32 %v127, 2147483648
    %v140 = vor.u32 1.1754944e-38, %v139
    %v141 = vsel %vm138, %v140, %v136
    %v142 = vmul.f32 %v117, %v141
    %v143 = vmin.f32 %v142, 1.0
    %v144 = vmax.f32 %v143, -1.0
    %v145 = vadd.f32 %v104, 1.0
    %v146 = vadd.f32 %v144, 1.0
    %v147 = vmul.f32 %v61, %v145
    %v148 = vmul.f32 %v62, %v146
    %v149 = vld [vmem:[%s3] sm:$0xff]
    %v150 = vld [vmem:[%s3 + $0x8] sm:$0xff]
    %v151 = vld [vmem:[%s3 + $0x10] sm:$0xff]
    %v152 = vld [vmem:[%s3 + $0x18] sm:$0xff]
    %v153 = vld [vmem:[%s3 + $0x20] sm:$0xff]
    %v154 = vld [vmem:[%s3 + $0x28] sm:$0xff]
    %v155 = vld [vmem:[%s3 + $0x30] sm:$0xff]
    %v156 = vld [vmem:[%s3 + $0x38] sm:$0xff]
    %v157 = vld [vmem:[%s3 + $0x40] sm:$0xff]
    %v158 = vld [vmem:[%s3 + $0x48] sm:$0xff]
    %v159 = vld [vmem:[%s3 + $0x50] sm:$0xff]
    %v160 = vld [vmem:[%s3 + $0x58] sm:$0xff]
    %v161 = vld [vmem:[%s3 + $0x60] sm:$0xff]
    %v162 = vld [vmem:[%s3 + $0x68] sm:$0xff]
    %v163 = vld [vmem:[%s3 + $0x70] sm:$0xff]
    %v164 = vld [vmem:[%s3 + $0x78] sm:$0xff]
    %v165 = vld [vmem:[%s4] sm:$0x1]
    %v167 = vperm.slane %v165, 0
    %169 = vmatpush.msra.mxu0 %v164
    %170 = vmatpush.msra.mxu0 %v163
    %171 = vmatpush.msra.mxu0 %v162
    %172 = vmatpush.msra.mxu0 %v161
    %173 = vmatpush.msra.mxu0 %v160
    %174 = vmatpush.msra.mxu0 %v159
    %175 = vmatpush.msra.mxu0 %v158
    %176 = vmatpush.msra.mxu0 %v157
    %177 = vmatpush.msra.mxu0 %v156
    %178 = vmatpush.msra.mxu0 %v155
    %179 = vmatpush.msra.mxu0 %v154
    %180 = vmatpush.msra.mxu0 %v153
    %181 = vmatpush.msra.mxu0 %v152
    %182 = vmatpush.msra.mxu0 %v151
    %183 = vmatpush.msra.mxu0 %v150
    %184 = vmatpush.msra.mxu0 %v149
    %185 = vmatmul.f32.gmra.mxu0 %v147
    %v186 = vpop.f32.mrf.mxu0
    %v187 = vadd.f32 %v167, %v186
    %188 = vmatmul.f32.gmra.mxu0 %v148
    %v189 = vpop.f32.mrf.mxu0
    %v190 = vadd.f32 %v167, %v189
    %191 = vdwg.mxu0
    %v192 = vadd.f32 %v21, %v187
    %v193 = vadd.f32 %v22, %v190
    %194 = vst.msk [vmem:[#allocation2] sm:$0xff] %vm31, %v192
    %195 = vst.msk [vmem:[#allocation2 + $0x8] sm:$0xff] %vm31, %v193
    // Predicated region
    $region22: #{tpu_custom_call.1} parent=1 // pred_check
      _
    $region23: #{tpu_custom_call.1} parent=1 // pred_check_branch
      %197 = sbr.rel (0) target = $region25
    $region24: #{tpu_custom_call.1} parent=1 // pred_region
      %199 = vsyncadd [#allocation3], 0
      %s200 = sshll.u32 [#allocation2], 4
      %s201 = int_to_ptr.vmem [resolvable:$true] %s200
      %s202 = sshll.u32 %s5, 4
      %s203 = int_to_ptr.hbm [resolvable:$true] %s202
      %208 = dma.vmem_to_hbm [thread:$0]  %s201, 256, %s203, [#allocation3], 128, 128, 8
    $region25: #{tpu_custom_call.1} parent=1 // pred_fallthru
      _
    // Predicated region
    $region26: #{tpu_custom_call.1} parent=1 // pred_check
      _
    $region27: #{tpu_custom_call.1} parent=1 // pred_check_branch
      %210 = sbr.rel (0) target = $region29
    $region28: #{tpu_custom_call.1} parent=1 // pred_region
      %212 = dma.done [#allocation3], 256
    $region29: #{tpu_custom_call.1} parent=1 // pred_fallthru
      _
    %213 = vsyncpa [#allocation3], 1

// kernel: tpu_custom_call.1
$region0: #{tpu_custom_call.1}
  #allocation0 [shape = 'u32[]', space=smem, size = 0x4, offset = 0x4, fixed_abs, tag = 'smem constant byte address 0x4 - core index']
  #allocation1 [shape = 'u32[72,128]{1,0:T(1,128)}', space=vmem, size = 0x9000, scoped, tag = 'internal scratch']
  %s0 = inlined_call_operand.vmem [shape: f32[16,32], index: 0, kind: input, shape index: {}]
  %s1 = inlined_call_operand.vmem [shape: f32[32,128], index: 1, kind: input, shape index: {}]
  %s2 = inlined_call_operand.vmem [shape: f32[1,128], index: 2, kind: input, shape index: {}]
  %s3 = inlined_call_operand.vmem [shape: f32[128,32], index: 3, kind: input, shape index: {}]
  %s4 = inlined_call_operand.vmem [shape: f32[1,32], index: 4, kind: input, shape index: {}]
  %s5 = inlined_call_operand.hbm [shape: f32[16,32], index: 5, kind: output, shape index: {}]
  %s6 = sld [smem:[#allocation0]]
  $region30: #{tpu_custom_call.1} parent=0
    _
  %s8 = ssub.s32 1, %s6
  %s9 = scalar_select 0, %s8, %s6
  $region1: #{tpu_custom_call.1} parent=0
    #allocation2 [shape = 'u8[8192]{0}', space=vmem, size = 0x2000, scoped, tag = 'output window, operand 0, single buffered']
    #allocation3 [shape = 's32[1]{0}', space=sflag, size = 0x4, scoped, tag = 'scoped memory for tpu_custom_call.1']
    %10 = vsyncpa [#allocation3], 0
    // Predicated region
    $region2: #{tpu_custom_call.1} parent=1 // pred_check
      _
    $region3: #{tpu_custom_call.1} parent=1 // pred_check_branch
      %12 = sbr.rel (0) target = $region5
    $region4: #{tpu_custom_call.1} parent=1 // pred_region
      _
    $region5: #{tpu_custom_call.1} parent=1 // pred_fallthru
      _
    // Predicated region
    $region6: #{tpu_custom_call.1} parent=1 // pred_check
      _
    $region7: #{tpu_custom_call.1} parent=1 // pred_check_branch
      %14 = sbr.rel (0) target = $region9
    $region8: #{tpu_custom_call.1} parent=1 // pred_region
      _
    $region9: #{tpu_custom_call.1} parent=1 // pred_fallthru
      _
    // Predicated region
    $region10: #{tpu_custom_call.1} parent=1 // pred_check
      _
    $region11: #{tpu_custom_call.1} parent=1 // pred_check_branch
      %16 = sbr.rel (0) target = $region13
    $region12: #{tpu_custom_call.1} parent=1 // pred_region
      _
    $region13: #{tpu_custom_call.1} parent=1 // pred_fallthru
      _
    // Predicated region
    $region14: #{tpu_custom_call.1} parent=1 // pred_check
      _
    $region15: #{tpu_custom_call.1} parent=1 // pred_check_branch
      %18 = sbr.rel (0) target = $region17
    $region16: #{tpu_custom_call.1} parent=1 // pred_region
      _
    $region17: #{tpu_custom_call.1} parent=1 // pred_fallthru
      _
    // Predicated region
    $region18: #{tpu_custom_call.1} parent=1 // pred_check
      _
    $region19: #{tpu_custom_call.1} parent=1 // pred_check_branch
      %20 = sbr.rel (0) target = $region21
    $region20: #{tpu_custom_call.1} parent=1 // pred_region
      _
    $region21: #{tpu_custom_call.1} parent=1 // pred_fallthru
      _
    %v21 = vld [vmem:[%s0] sm:$0xff]
    %v22 = vld [vmem:[%s0 + $0x8] sm:$0xff]
    %v23 = vld [vmem:[%s1] sm:$0xff]
    %v24 = vld [vmem:[%s1 + $0x8] sm:$0xff]
    %v25 = vld [vmem:[%s1 + $0x10] sm:$0xff]
    %v26 = vld [vmem:[%s1 + $0x18] sm:$0xff]
    %v27 = vld [vmem:[%s2] sm:$0x1]
    %v29 = vperm.slane %v27, 0
    %vm31 = vcmask 261120
    %v33 = vsel %vm31, %v21, 0
    %v36 = vsel %vm31, %v22, 0
    %38 = vmatpush.msra.mxu0 0.0
    %39 = vmatpush.msra.mxu0 0.0
    %40 = vmatpush.msra.mxu0 0.0
    %41 = vmatpush.msra.mxu0 0.0
    %42 = vmatpush.msra.mxu0 0.0
    %43 = vmatpush.msra.mxu0 0.0
    %44 = vmatpush.msra.mxu0 0.0
    %45 = vmatpush.msra.mxu0 0.0
    %46 = vmatpush.msra.mxu0 0.0
    %47 = vmatpush.msra.mxu0 0.0
    %48 = vmatpush.msra.mxu0 0.0
    %49 = vmatpush.msra.mxu0 0.0
    %50 = vmatpush.msra.mxu0 %v26
    %51 = vmatpush.msra.mxu0 %v25
    %52 = vmatpush.msra.mxu0 %v24
    %53 = vmatpush.msra.mxu0 %v23
    %54 = vmatmul.f32.gmra.mxu0 %v33
    %v55 = vpop.f32.mrf.mxu0
    %v56 = vadd.f32 %v29, %v55
    %57 = vmatmul.f32.gmra.mxu0 %v36
    %v58 = vpop.f32.mrf.mxu0
    %v59 = vadd.f32 %v29, %v58
    %60 = vdwg.mxu0
    %v61 = vmul.f32 %v56, 0.5
    %v62 = vmul.f32 %v59, 0.5
    %v63 = vmul.f32 %v56, 0.70710677
    %v64 = vmul.f32 %v59, 0.70710677
    %v65 = vmul.f32 %v63, %v63
    %v66 = vmin.f32 16.0, %v65
    %v67 = vmul.f32 %v66, 2.1237322e-06
    %v68 = vadd.f32 %v67, 0.00028619796
    %v69 = vmul.f32 %v66, %v68
    %v70 = vadd.f32 %v69, 0.0036580483
    %v71 = vmul.f32 %v66, %v70
    %v72 = vadd.f32 %v71, 0.05243302
    %v73 = vmul.f32 %v66, %v72
    %v74 = vadd.f32 %v73, 0.18741608
    %v75 = vmul.f32 %v66, %v74
    %v76 = vadd.f32 %v75, 1.1283791
    %v77 = vmul.f32 %v63, %v76
    %v78 = vmul.f32 %v66, 3.8918573e-05
    %v79 = vadd.f32 %v78, 0.001143296
    %v80 = vmul.f32 %v66, %v79
    %v81 = vadd.f32 %v80, 0.014752088
    %v82 = vmul.f32 %v66, %v81
    %v83 = vadd.f32 %v82, 0.112945676
    %v84 = vmul.f32 %v66, %v83
    %v85 = vadd.f32 %v84, 0.4994258
    %v86 = vmul.f32 %v66, %v85
    %v87 = vadd.f32 %v86, 1.0
    %v88 = vrcp.pop %v87
    %v89 = vmul.f32 %v87, %v88
    %v90 = vsub.f32 1.0, %v89
    %v91 = vmul.f32 %v88, %v90
    %v92 = vadd.f32 %v88, %v91
    %vm93 = vweird.f32 %v87
    %vm94 = vweird.f32 %v88
    %vm95 = vmor %vm93, %vm94
    %v96 = vsel %vm95, %v88, %v92
    %v97 = vand.u32 2147483647, %v87
    %vm98 = vcmp.eq.f32.partialorder %v97, 8.507059e+37
    %v99 = vand.u32 %v87, 2147483648
    %v100 = vor.u32 1.1754944e-38, %v99
    %v101 = vsel %vm98, %v100, %v96
    %v102 = vmul.f32 %v77, %v101
    %v103 = vmin.f32 %v102, 1.0
    %v104 = vmax.f32 %v103, -1.0
    %v105 = vmul.f32 %v64, %v64
    %v106 = vmin.f32 16.0, %v105
    %v107 = vmul.f32 %v106, 2.1237322e-06
    %v108 = vadd.f32 %v107, 0.00028619796
    %v109 = vmul.f32 %v106, %v108
    %v110 = vadd.f32 %v109, 0.0036580483
    %v111 = vmul.f32 %v106, %v110
    %v112 = vadd.f32 %v111, 0.05243302
    %v113 = vmul.f32 %v106, %v112
    %v114 = vadd.f32 %v113, 0.18741608
    %v115 = vmul.f32 %v106, %v114
    %v116 = vadd.f32 %v115, 1.1283791
    %v117 = vmul.f32 %v64, %v116
    %v118 = vmul.f32 %v106, 3.8918573e-05
    %v119 = vadd.f32 %v118, 0.001143296
    %v120 = vmul.f32 %v106, %v119
    %v121 = vadd.f32 %v120, 0.014752088
    %v122 = vmul.f32 %v106, %v121
    %v123 = vadd.f32 %v122, 0.112945676
    %v124 = vmul.f32 %v106, %v123
    %v125 = vadd.f32 %v124, 0.4994258
    %v126 = vmul.f32 %v106, %v125
    %v127 = vadd.f32 %v126, 1.0
    %v128 = vrcp.pop %v127
    %v129 = vmul.f32 %v127, %v128
    %v130 = vsub.f32 1.0, %v129
    %v131 = vmul.f32 %v128, %v130
    %v132 = vadd.f32 %v128, %v131
    %vm133 = vweird.f32 %v127
    %vm134 = vweird.f32 %v128
    %vm135 = vmor %vm133, %vm134
    %v136 = vsel %vm135, %v128, %v132
    %v137 = vand.u32 2147483647, %v127
    %vm138 = vcmp.eq.f32.partialorder %v137, 8.507059e+37
    %v139 = vand.u32 %v127, 2147483648
    %v140 = vor.u32 1.1754944e-38, %v139
    %v141 = vsel %vm138, %v140, %v136
    %v142 = vmul.f32 %v117, %v141
    %v143 = vmin.f32 %v142, 1.0
    %v144 = vmax.f32 %v143, -1.0
    %v145 = vadd.f32 %v104, 1.0
    %v146 = vadd.f32 %v144, 1.0
    %v147 = vmul.f32 %v61, %v145
    %v148 = vmul.f32 %v62, %v146
    %v149 = vld [vmem:[%s3] sm:$0xff]
    %v150 = vld [vmem:[%s3 + $0x8] sm:$0xff]
    %v151 = vld [vmem:[%s3 + $0x10] sm:$0xff]
    %v152 = vld [vmem:[%s3 + $0x18] sm:$0xff]
    %v153 = vld [vmem:[%s3 + $0x20] sm:$0xff]
    %v154 = vld [vmem:[%s3 + $0x28] sm:$0xff]
    %v155 = vld [vmem:[%s3 + $0x30] sm:$0xff]
    %v156 = vld [vmem:[%s3 + $0x38] sm:$0xff]
    %v157 = vld [vmem:[%s3 + $0x40] sm:$0xff]
    %v158 = vld [vmem:[%s3 + $0x48] sm:$0xff]
    %v159 = vld [vmem:[%s3 + $0x50] sm:$0xff]
    %v160 = vld [vmem:[%s3 + $0x58] sm:$0xff]
    %v161 = vld [vmem:[%s3 + $0x60] sm:$0xff]
    %v162 = vld [vmem:[%s3 + $0x68] sm:$0xff]
    %v163 = vld [vmem:[%s3 + $0x70] sm:$0xff]
    %v164 = vld [vmem:[%s3 + $0x78] sm:$0xff]
    %v165 = vld [vmem:[%s4] sm:$0x1]
    %v167 = vperm.slane %v165, 0
    %169 = vmatpush.msra.mxu0 %v164
    %170 = vmatpush.msra.mxu0 %v163
    %171 = vmatpush.msra.mxu0 %v162
    %172 = vmatpush.msra.mxu0 %v161
    %173 = vmatpush.msra.mxu0 %v160
    %174 = vmatpush.msra.mxu0 %v159
    %175 = vmatpush.msra.mxu0 %v158
    %176 = vmatpush.msra.mxu0 %v157
    %177 = vmatpush.msra.mxu0 %v156
    %178 = vmatpush.msra.mxu0 %v155
    %179 = vmatpush.msra.mxu0 %v154
    %180 = vmatpush.msra.mxu0 %v153
    %181 = vmatpush.msra.mxu0 %v152
    %182 = vmatpush.msra.mxu0 %v151
    %183 = vmatpush.msra.mxu0 %v150
    %184 = vmatpush.msra.mxu0 %v149
    %185 = vmatmul.f32.gmra.mxu0 %v147
    %v186 = vpop.f32.mrf.mxu0
    %v187 = vadd.f32 %v167, %v186
    %188 = vmatmul.f32.gmra.mxu0 %v148
    %v189 = vpop.f32.mrf.mxu0
    %v190 = vadd.f32 %v167, %v189
    %191 = vdwg.mxu0
    %v192 = vadd.f32 %v21, %v187
    %v193 = vadd.f32 %v22, %v190
    %194 = vst.msk [vmem:[#allocation2] sm:$0xff] %vm31, %v192
    %195 = vst.msk [vmem:[#allocation2 + $0x8] sm:$0xff] %vm31, %v193
    // Predicated region
    $region22: #{tpu_custom_call.1} parent=1 // pred_check
      _
    $region23: #{tpu_custom_call.1} parent=1 // pred_check_branch
      %197 = sbr.rel (0) target = $region25
    $region24: #{tpu_custom_call.1} parent=1 // pred_region
      %199 = vsyncadd [#allocation3], 0
      %s200 = sshll.u32 [#allocation2], 4
      %s201 = int_to_ptr.vmem [resolvable:$true] %s200
      %s202 = sshll.u32 %s5, 4
      %s203 = int_to_ptr.hbm [resolvable:$true] %s202
      %208 = dma.vmem_to_hbm [thread:$0]  %s201, 256, %s203, [#allocation3], 128, 128, 8
    $region25: #{tpu_custom_call.1} parent=1 // pred_fallthru
      _
    // Predicated region
    $region26: #{tpu_custom_call.1} parent=1 // pred_check
      _
    $region27: #{tpu_custom_call.1} parent=1 // pred_check_branch
      %210 = sbr.rel (0) target = $region29
    $region28: #{tpu_custom_call.1} parent=1 // pred_region
      %212 = dma.done [#allocation3], 256
    $region29: #{tpu_custom_call.1} parent=1 // pred_fallthru
      _
    %213 = vsyncpa [#allocation3], 1

</llo_original>
